<compile_context>
chip_gen: v6e
topology: v6e:2x2x1
jax: 0.10.0
libtpu: 0.0.40
codegen_flags: <defaults>
</compile_context>

<pallas_src>
import functools
import math

import jax
import jax.numpy as jnp
from jax.experimental import pallas as pl
from jax.experimental.pallas import tpu as pltpu

CLAMP = 0.9999
LANE = 128


def actor_kernel(x_ref, eps_ref, w1_ref, b1_ref, w2_ref, b2_ref, out_ref,
                 *, c, is_training):
    """One batch-tile of the full ActorNetSmoothSmall forward."""
    x = x_ref[...].astype(jnp.float32)
    h = jnp.dot(x, w1_ref[...], preferred_element_type=jnp.float32) + b1_ref[...]
    h = jnp.maximum(h, 0.0)                                        # ReLU
    z = jnp.dot(h, w2_ref[...], preferred_element_type=jnp.float32) + b2_ref[...]
    out = jnp.tanh(z)
    if is_training:
        out = jnp.clip(out + c * eps_ref[...].astype(jnp.float32), -CLAMP, CLAMP)
    out_ref[...] = out.astype(out_ref.dtype)                       # lane-dense store


def actor_forward(x, eps_p, w1, b1, w2p, b2p, *, n_act, c=0.1,
                  is_training=True, max_tb=1024):
    """x: [B, dim_obs]; eps_p: [B, Np] standard-normal noise at the lane-padded width.

    Returns (out[:B, :n_act], None) matching the PyTorch module.
    """
    B, D = x.shape
    Np = w2p.shape[1]

    if B <= max_tb:
        tb, Bp = B, B                        # single tile = whole batch, no padding op
        x_p, e_p = x, eps_p
    else:                                    # large batch: big tiles, pad ragged tail once
        tb = max_tb
        Bp = pl.cdiv(B, tb) * tb
        x_p = jnp.zeros((Bp, D), x.dtype).at[:B].set(x)
        e_p = jnp.zeros((Bp, Np), eps_p.dtype).at[:B].set(eps_p)

    kernel = functools.partial(actor_kernel, c=float(c), is_training=bool(is_training))

    def full_spec(arr):                      # params resident in VMEM every step
        return pl.BlockSpec(arr.shape, lambda i: (0, 0))

    out = pl.pallas_call(
        kernel,
        grid=(Bp // tb,),
        in_specs=[pl.BlockSpec((tb, D), lambda i: (i, 0)),
                  pl.BlockSpec((tb, Np), lambda i: (i, 0)),
                  full_spec(w1), full_spec(b1), full_spec(w2p), full_spec(b2p)],
        out_specs=pl.BlockSpec((tb, Np), lambda i: (i, 0)),
        out_shape=jax.ShapeDtypeStruct((Bp, Np), jnp.float32),
        compiler_params=pltpu.CompilerParams(dimension_semantics=("parallel",)),
    )(x_p, e_p, w1, b1, w2p, b2p)

    return out[:B, :n_act], None


def init_params(key, dim_obs, dim_act, n_hidden):
    """PyTorch nn.Linear-style init (U[-1/sqrt(fan_in), 1/sqrt(fan_in)]).

    Weights are stored [in_features, out_features] (transpose of torch storage).
    The head weight/bias are lane-padded to a multiple of 128 columns so the
    kernel output is lane-dense; extra columns are zero and sliced off in the wrapper.
    """
    k1, k2, k3, k4 = jax.random.split(key, 4)

    def uni(k, shape, fan_in):
        bound = 1.0 / math.sqrt(fan_in)
        return jax.random.uniform(k, shape, jnp.float32, -bound, bound)

    w1 = uni(k1, (dim_obs, n_hidden), dim_obs)
    b1 = uni(k2, (1, n_hidden), dim_obs)
    w2 = uni(k3, (n_hidden, dim_act), n_hidden)
    b2 = uni(k4, (1, dim_act), n_hidden)

    n_pad = max(LANE, pl.cdiv(dim_act, LANE) * LANE)
    w2p = jnp.zeros((n_hidden, n_pad), jnp.float32).at[:, :dim_act].set(w2)
    b2p = jnp.zeros((1, n_pad), jnp.float32).at[:, :dim_act].set(b2)
    return w1, b1, w2p, b2p


def reference_forward(x, eps_p, w1, b1, w2p, b2p, n_act, c, is_training):
    """Pure-JAX reference with the same math (for a correctness spot-check)."""
    hp = jax.lax.Precision.HIGHEST
    h = jnp.maximum(jnp.dot(x, w1, precision=hp) + b1, 0.0)
    out = jnp.tanh(jnp.dot(h, w2p, precision=hp) + b2p)
    if is_training:
        out = jnp.clip(out + c * eps_p, -CLAMP, CLAMP)
    return out[:, :n_act]


if __name__ == "__main__":
    # Small, module-consistent shapes: n_state=(16,), n_action=(4,), n_hidden=256, batch=2.
    DIM_OBS, DIM_ACT, N_HIDDEN, BATCH, C = 16, 4, 256, 2, 0.1

    root = jax.random.PRNGKey(0)
    k_param, k_x, k_eps = jax.random.split(root, 3)

    w1, b1, w2p, b2p = init_params(k_param, DIM_OBS, DIM_ACT, N_HIDDEN)
    x = jax.random.normal(k_x, (BATCH, DIM_OBS), jnp.float32)
    # TODO(synk): torch.randn_like noise is drawn outside the kernel (reparameterized) and
    # generated directly at the lane-padded width, so no host-side pad op is needed.
    eps = jax.random.normal(k_eps, (BATCH, w2p.shape[1]), jnp.float32)

    out, extra = actor_forward(x, eps, w1, b1, w2p, b2p,
                               n_act=DIM_ACT, c=C, is_training=True)
    jax.block_until_ready(out)

    ref = reference_forward(x, eps, w1, b1, w2p, b2p, DIM_ACT, C, True)

    assert out.shape == (BATCH, DIM_ACT)
    assert extra is None
    assert bool(jnp.all(jnp.abs(out) <= CLAMP + 1e-6))
    assert bool(jnp.allclose(out, ref, atol=2e-3, rtol=2e-3))
    print("KERNEL_OK")
</pallas_src>

<mosaic_0001>
module attributes {stable_mosaic.version = 11 : i64} {
  func.func @actor_kernel(%arg0: i32, %arg1: memref<2x16xf32, #tpu.memory_space<vmem>>, %arg2: memref<2x128xf32, #tpu.memory_space<vmem>>, %arg3: memref<16x256xf32, #tpu.memory_space<vmem>>, %arg4: memref<1x256xf32, #tpu.memory_space<vmem>>, %arg5: memref<256x128xf32, #tpu.memory_space<vmem>>, %arg6: memref<1x128xf32, #tpu.memory_space<vmem>>, %arg7: memref<2x128xf32, #tpu.memory_space<vmem>>) attributes {dimension_semantics = [#tpu.dimension_semantics<parallel>], iteration_bounds = array<i64: 1>, scalar_prefetch = 0 : i64, scratch_operands = 0 : i64, tpu.core_type = #tpu.core_type<tc>, window_params = [{transform_indices = @transform_0, window_bounds = array<i64: 2, 16>}, {transform_indices = @transform_1, window_bounds = array<i64: 2, 128>}, {pipeline_mode = #tpu.pipeline_mode<synchronous>, transform_indices = @transform_2, window_bounds = array<i64: 16, 256>}, {pipeline_mode = #tpu.pipeline_mode<synchronous>, transform_indices = @transform_3, window_bounds = array<i64: 1, 256>}, {pipeline_mode = #tpu.pipeline_mode<synchronous>, transform_indices = @transform_4, window_bounds = array<i64: 256, 128>}, {pipeline_mode = #tpu.pipeline_mode<synchronous>, transform_indices = @transform_5, window_bounds = array<i64: 1, 128>}, {transform_indices = @transform_6, window_bounds = array<i64: 2, 128>}]} {
    %c0 = arith.constant 0 : index
    %c0_0 = arith.constant 0 : index
    %0 = vector.load %arg1[%c0, %c0_0] : memref<2x16xf32, #tpu.memory_space<vmem>>, vector<2x16xf32>
    %c0_1 = arith.constant 0 : index
    %c0_2 = arith.constant 0 : index
    %1 = vector.load %arg3[%c0_1, %c0_2] : memref<16x256xf32, #tpu.memory_space<vmem>>, vector<16x256xf32>
    %cst = arith.constant dense<0.000000e+00> : vector<2x256xf32>
    %2 = tpu.matmul %0, %1, %cst {dimension_numbers = #tpu.dot_dimension_numbers<[1], [0], [0], [1], [0, 0, 1, 1], [], []>} : vector<2x16xf32>, vector<16x256xf32>, vector<2x256xf32> -> vector<2x256xf32>
    %c0_3 = arith.constant 0 : index
    %c0_4 = arith.constant 0 : index
    %3 = vector.load %arg4[%c0_3, %c0_4] : memref<1x256xf32, #tpu.memory_space<vmem>>, vector<1x256xf32>
    %4 = vector.broadcast %3 : vector<1x256xf32> to vector<2x256xf32>
    %5 = arith.addf %2, %4 : vector<2x256xf32>
    %cst_5 = arith.constant 0.000000e+00 : f32
    %6 = vector.broadcast %cst_5 : f32 to vector<2x256xf32>
    %7 = arith.maximumf %5, %6 : vector<2x256xf32>
    %c0_6 = arith.constant 0 : index
    %c0_7 = arith.constant 0 : index
    %8 = vector.load %arg5[%c0_6, %c0_7] : memref<256x128xf32, #tpu.memory_space<vmem>>, vector<256x128xf32>
    %cst_8 = arith.constant dense<0.000000e+00> : vector<2x128xf32>
    %9 = tpu.matmul %7, %8, %cst_8 {dimension_numbers = #tpu.dot_dimension_numbers<[1], [0], [0], [1], [0, 0, 1, 1], [], []>} : vector<2x256xf32>, vector<256x128xf32>, vector<2x128xf32> -> vector<2x128xf32>
    %c0_9 = arith.constant 0 : index
    %c0_10 = arith.constant 0 : index
    %10 = vector.load %arg6[%c0_9, %c0_10] : memref<1x128xf32, #tpu.memory_space<vmem>>, vector<1x128xf32>
    %11 = vector.broadcast %10 : vector<1x128xf32> to vector<2x128xf32>
    %12 = arith.addf %9, %11 : vector<2x128xf32>
    %13 = math.tanh %12 : vector<2x128xf32>
    %c0_11 = arith.constant 0 : index
    %c0_12 = arith.constant 0 : index
    %14 = vector.load %arg2[%c0_11, %c0_12] : memref<2x128xf32, #tpu.memory_space<vmem>>, vector<2x128xf32>
    %cst_13 = arith.constant 1.000000e-01 : f32
    %15 = vector.broadcast %cst_13 : f32 to vector<2x128xf32>
    %16 = arith.mulf %15, %14 : vector<2x128xf32>
    %17 = arith.addf %13, %16 : vector<2x128xf32>
    %cst_14 = arith.constant -0.999899983 : f32
    %cst_15 = arith.constant 0.999899983 : f32
    %18 = vector.broadcast %cst_14 : f32 to vector<2x128xf32>
    %19 = arith.maximumf %18, %17 : vector<2x128xf32>
    %20 = vector.broadcast %cst_15 : f32 to vector<2x128xf32>
    %21 = arith.minimumf %20, %19 : vector<2x128xf32>
    %c0_16 = arith.constant 0 : index
    %c0_17 = arith.constant 0 : index
    %22 = vector.load %arg7[%c0_16, %c0_17] : memref<2x128xf32, #tpu.memory_space<vmem>>, vector<2x128xf32>
    tpu.vector_store %arg7[%c0_16, %c0_17], %21 {strides = array<i32>} : memref<2x128xf32, #tpu.memory_space<vmem>>, vector<2x128xf32>,
    return
  }
  func.func @transform_0(%arg0: i32) -> (i32, i32) {
    %c0_i32 = arith.constant 0 : i32
    %c0_i32_0 = arith.constant 0 : i32
    return %arg0, %c0_i32 : i32, i32
  }
  func.func @transform_1(%arg0: i32) -> (i32, i32) {
    %c0_i32 = arith.constant 0 : i32
    %c0_i32_0 = arith.constant 0 : i32
    return %arg0, %c0_i32 : i32, i32
  }
  func.func @transform_2(%arg0: i32) -> (i32, i32) {
    %c0_i32 = arith.constant 0 : i32
    %c0_i32_0 = arith.constant 0 : i32
    %c0_i32_1 = arith.constant 0 : i32
    return %c0_i32, %c0_i32_0 : i32, i32
  }
  func.func @transform_3(%arg0: i32) -> (i32, i32) {
    %c0_i32 = arith.constant 0 : i32
    %c0_i32_0 = arith.constant 0 : i32
    %c0_i32_1 = arith.constant 0 : i32
    return %c0_i32, %c0_i32_0 : i32, i32
  }
  func.func @transform_4(%arg0: i32) -> (i32, i32) {
    %c0_i32 = arith.constant 0 : i32
    %c0_i32_0 = arith.constant 0 : i32
    %c0_i32_1 = arith.constant 0 : i32
    return %c0_i32, %c0_i32_0 : i32, i32
  }
  func.func @transform_5(%arg0: i32) -> (i32, i32) {
    %c0_i32 = arith.constant 0 : i32
    %c0_i32_0 = arith.constant 0 : i32
    %c0_i32_1 = arith.constant 0 : i32
    return %c0_i32, %c0_i32_0 : i32, i32
  }
  func.func @transform_6(%arg0: i32) -> (i32, i32) {
    %c0_i32 = arith.constant 0 : i32
    %c0_i32_0 = arith.constant 0 : i32
    return %arg0, %c0_i32 : i32, i32
  }
}

</mosaic_0001>

<llo_original>
// kernel: tpu_custom_call.1
$region0: #{tpu_custom_call.1}
  #allocation0 [shape = 'u32[]', space=smem, size = 0x4, offset = 0x4, fixed_abs, tag = 'smem constant byte address 0x4 - core index']
  #allocation1 [shape = 'u32[144,128]{1,0:T(1,128)}', space=vmem, size = 0x12000, scoped, tag = 'internal scratch']
  %s0 = inlined_call_operand.hbm [shape: f32[2,16], index: 0, kind: input, shape index: {}]
  %s1 = inlined_call_operand.hbm [shape: f32[2,128], index: 1, kind: input, shape index: {}]
  %s2 = inlined_call_operand.hbm [shape: f32[16,256], index: 2, kind: input, shape index: {}]
  %s3 = inlined_call_operand.vmem [shape: f32[1,256], index: 3, kind: input, shape index: {}]
  %s4 = inlined_call_operand.hbm [shape: f32[256,128], index: 4, kind: input, shape index: {}]
  %s5 = inlined_call_operand.vmem [shape: f32[1,128], index: 5, kind: input, shape index: {}]
  %s6 = inlined_call_operand.hbm [shape: f32[2,128], index: 6, kind: output, shape index: {}]
  %s7 = sld [smem:[#allocation0]]
  $region50: #{tpu_custom_call.1} parent=0
    _
  %s9 = ssub.s32 1, %s7
  %s10 = scalar_select 0, %s9, %s7
  $region1: #{tpu_custom_call.1} parent=0
    #allocation2 [shape = 'u8[1024]{0}', space=vmem, size = 0x400, scoped, tag = 'input window, operand 0, single buffered']
    #allocation3 [shape = 's32[1]{0}', space=sflag, size = 0x4, scoped, tag = 'scoped memory for tpu_custom_call.1']
    #allocation4 [shape = 's32[1]{0}', space=sflag, size = 0x4, scoped, tag = 'scoped memory for tpu_custom_call.1']
    #allocation5 [shape = 'u8[1024]{0}', space=vmem, size = 0x400, scoped, tag = 'input window, operand 1, single buffered']
    #allocation6 [shape = 's32[1]{0}', space=sflag, size = 0x4, scoped, tag = 'scoped memory for tpu_custom_call.1']
    #allocation7 [shape = 'u8[16384]{0}', space=vmem, size = 0x4000, scoped, tag = 'input window, operand 2, single buffered']
    #allocation8 [shape = 'u8[131072]{0}', space=vmem, size = 0x20000, scoped, tag = 'input window, operand 4, single buffered']
    #allocation9 [shape = 's32[1]{0}', space=sflag, size = 0x4, scoped, tag = 'scoped memory for tpu_custom_call.1']
    #allocation10 [shape = 'u8[1024]{0}', space=vmem, size = 0x400, scoped, tag = 'output window, operand 0, single buffered']
    %11 = vsyncpa [#allocation3], 0
    %12 = vsyncpa [#allocation6], 0
    %13 = vsyncpa [#allocation9], 0
    %14 = vsyncpa [#allocation4], 0
    // Predicated region
    $region2: #{tpu_custom_call.1} parent=1 // pred_check
      _
    $region3: #{tpu_custom_call.1} parent=1 // pred_check_branch
      %16 = sbr.rel (0) target = $region5
    $region4: #{tpu_custom_call.1} parent=1 // pred_region
      %s18 = ssub.s32 32, 32
      %19 = vsyncadd [#allocation3], %s18
      %s21 = sshll.u32 [#allocation2], 4
      %s22 = int_to_ptr.vmem [resolvable:$true] %s21
      %24 = dma.hbm_to_vmem [thread:$0]  %s0, 32, %s22, [#allocation3]
    $region5: #{tpu_custom_call.1} parent=1 // pred_fallthru
      _
    // Predicated region
    $region6: #{tpu_custom_call.1} parent=1 // pred_check
      _
    $region7: #{tpu_custom_call.1} parent=1 // pred_check_branch
      %26 = sbr.rel (0) target = $region9
    $region8: #{tpu_custom_call.1} parent=1 // pred_region
      %s28 = ssub.s32 32, 32
      %29 = vsyncadd [#allocation6], %s28
      %s31 = sshll.u32 [#allocation5], 4
      %s32 = int_to_ptr.vmem [resolvable:$true] %s31
      %34 = dma.hbm_to_vmem [thread:$0]  %s1, 32, %s32, [#allocation6]
    $region9: #{tpu_custom_call.1} parent=1 // pred_fallthru
      _
    // Predicated region
    $region10: #{tpu_custom_call.1} parent=1 // pred_check
      _
    $region11: #{tpu_custom_call.1} parent=1 // pred_check_branch
      %36 = sbr.rel (0) target = $region13
    $region12: #{tpu_custom_call.1} parent=1 // pred_region
      %s38 = ssub.s32 512, 512
      %39 = vsyncadd [#allocation6], %s38
      %s40 = sshll.u32 [#allocation7], 4
      %s41 = int_to_ptr.vmem [resolvable:$true] %s40
      %46 = dma.hbm_to_vmem [thread:$0]  %s2, 512, %s41, [#allocation6], 256, 256, 16
    $region13: #{tpu_custom_call.1} parent=1 // pred_fallthru
      _
    // Predicated region
    $region14: #{tpu_custom_call.1} parent=1 // pred_check
      _
    $region15: #{tpu_custom_call.1} parent=1 // pred_check_branch
      %48 = sbr.rel (0) target = $region17
    $region16: #{tpu_custom_call.1} parent=1 // pred_region
      _
    $region17: #{tpu_custom_call.1} parent=1 // pred_fallthru
      _
    // Predicated region
    $region18: #{tpu_custom_call.1} parent=1 // pred_check
      _
    $region19: #{tpu_custom_call.1} parent=1 // pred_check_branch
      %50 = sbr.rel (0) target = $region21
    $region20: #{tpu_custom_call.1} parent=1 // pred_region
      %s52 = ssub.s32 4096, 4096
      %53 = vsyncadd [#allocation9], %s52
      %s54 = sshll.u32 [#allocation8], 4
      %s55 = int_to_ptr.vmem [resolvable:$true] %s54
      %60 = dma.hbm_to_vmem [thread:$0]  %s4, 4096, %s55, [#allocation9], 128, 128, 8
    $region21: #{tpu_custom_call.1} parent=1 // pred_fallthru
      _
    // Predicated region
    $region22: #{tpu_custom_call.1} parent=1 // pred_check
      _
    $region23: #{tpu_custom_call.1} parent=1 // pred_check_branch
      %62 = sbr.rel (0) target = $region25
    $region24: #{tpu_custom_call.1} parent=1 // pred_region
      _
    $region25: #{tpu_custom_call.1} parent=1 // pred_fallthru
      _
    // Predicated region
    $region26: #{tpu_custom_call.1} parent=1 // pred_check
      _
    $region27: #{tpu_custom_call.1} parent=1 // pred_check_branch
      %64 = sbr.rel (0) target = $region29
    $region28: #{tpu_custom_call.1} parent=1 // pred_region
      %65 = dma.done [#allocation3], 32
    $region29: #{tpu_custom_call.1} parent=1 // pred_fallthru
      _
    // Predicated region
    $region30: #{tpu_custom_call.1} parent=1 // pred_check
      _
    $region31: #{tpu_custom_call.1} parent=1 // pred_check_branch
      %67 = sbr.rel (0) target = $region33
    $region32: #{tpu_custom_call.1} parent=1 // pred_region
      %68 = dma.done [#allocation6], 32
    $region33: #{tpu_custom_call.1} parent=1 // pred_fallthru
      _
    // Predicated region
    $region34: #{tpu_custom_call.1} parent=1 // pred_check
      _
    $region35: #{tpu_custom_call.1} parent=1 // pred_check_branch
      %70 = sbr.rel (0) target = $region37
    $region36: #{tpu_custom_call.1} parent=1 // pred_region
      %71 = dma.done [#allocation6], 512
    $region37: #{tpu_custom_call.1} parent=1 // pred_fallthru
      _
    // Predicated region
    $region38: #{tpu_custom_call.1} parent=1 // pred_check
      _
    $region39: #{tpu_custom_call.1} parent=1 // pred_check_branch
      %73 = sbr.rel (0) target = $region41
    $region40: #{tpu_custom_call.1} parent=1 // pred_region
      %74 = dma.done [#allocation9], 4096
    $region41: #{tpu_custom_call.1} parent=1 // pred_fallthru
      _
    %v75 = vld [vmem:[#allocation2] sm:$0x3]
    %v76 = vld [vmem:[#allocation7] sm:$0xff]
    %v77 = vld [vmem:[#allocation7 + $0x8] sm:$0xff]
    %v78 = vld [vmem:[#allocation7 + $0x10] sm:$0xff]
    %v79 = vld [vmem:[#allocation7 + $0x18] sm:$0xff]
    %v80 = vld [vmem:[%s3] sm:$0x3]
    %v82 = vlaneseq
    %v83 = vshrl.u32 %v82, 7
    %v84 = vsub.s32 0, %v83
    %v85 = vrot.slane %v80, %v84
    %v86 = vlaneseq
    %v87 = vshrl.u32 %v86, 7
    %v88 = vsub.s32 1, %v87
    %v89 = vrot.slane %v80, %v88
    %vm92 = vcmask 130048
    %v94 = vsel %vm92, %v75, 0
    %96 = vmatprep.subr.mxu0 0.0
    %97 = vmatpush1.msra.mxu0 0.0
    %98 = vmatprep.subr.mxu0 0.0
    %99 = vmatpush1.msra.mxu0 0.0
    %100 = vmatprep.subr.mxu0 0.0
    %101 = vmatpush1.msra.mxu0 0.0
    %102 = vmatprep.subr.mxu0 0.0
    %103 = vmatpush1.msra.mxu0 0.0
    %104 = vmatprep.subr.mxu0 0.0
    %105 = vmatpush1.msra.mxu0 0.0
    %106 = vmatprep.subr.mxu0 0.0
    %107 = vmatpush1.msra.mxu0 0.0
    %108 = vmatprep.subr.mxu0 0.0
    %109 = vmatpush1.msra.mxu0 0.0
    %110 = vmatprep.subr.mxu0 0.0
    %111 = vmatpush1.msra.mxu0 0.0
    %112 = vmatprep.subr.mxu0 0.0
    %113 = vmatpush1.msra.mxu0 0.0
    %114 = vmatprep.subr.mxu0 0.0
    %115 = vmatpush1.msra.mxu0 0.0
    %116 = vmatprep.subr.mxu0 0.0
    %117 = vmatpush1.msra.mxu0 0.0
    %118 = vmatprep.subr.mxu0 0.0
    %119 = vmatpush1.msra.mxu0 0.0
    %120 = vmatprep.subr.mxu0 0.0
    %121 = vmatpush1.msra.mxu0 0.0
    %122 = vmatprep.subr.mxu0 0.0
    %123 = vmatpush1.msra.mxu0 0.0
    %124 = vmatprep.subr.mxu0 %v79
    %125 = vmatpush1.msra.mxu0 %v78
    %126 = vmatprep.subr.mxu0 %v77
    %127 = vmatpush1.msra.mxu0 %v76
    %128 = vmatprep.subr.mxu0 0.0
    %129 = vmatpush2.msra.mxu0 0.0
    %130 = vmatprep.subr.mxu0 0.0
    %131 = vmatpush2.msra.mxu0 0.0
    %132 = vmatprep.subr.mxu0 0.0
    %133 = vmatpush2.msra.mxu0 0.0
    %134 = vmatprep.subr.mxu0 0.0
    %135 = vmatpush2.msra.mxu0 0.0
    %136 = vmatprep.subr.mxu0 0.0
    %137 = vmatpush2.msra.mxu0 0.0
    %138 = vmatprep.subr.mxu0 0.0
    %139 = vmatpush2.msra.mxu0 0.0
    %140 = vmatprep.subr.mxu0 0.0
    %141 = vmatpush2.msra.mxu0 0.0
    %142 = vmatprep.subr.mxu0 0.0
    %143 = vmatpush2.msra.mxu0 0.0
    %144 = vmatprep.subr.mxu0 0.0
    %145 = vmatpush2.msra.mxu0 0.0
    %146 = vmatprep.subr.mxu0 0.0
    %147 = vmatpush2.msra.mxu0 0.0
    %148 = vmatprep.subr.mxu0 0.0
    %149 = vmatpush2.msra.mxu0 0.0
    %150 = vmatprep.subr.mxu0 0.0
    %151 = vmatpush2.msra.mxu0 0.0
    %152 = vmatprep.subr.mxu0 0.0
    %153 = vmatpush2.msra.mxu0 0.0
    %154 = vmatprep.subr.mxu0 0.0
    %155 = vmatpush2.msra.mxu0 0.0
    %156 = vmatprep.subr.mxu0 0.0
    %157 = vmatpush2.msra.mxu0 0.0
    %158 = vmatprep.subr.mxu0 0.0
    %159 = vmatpush2.msra.mxu0 0.0
    %160 = vmatprep.mubr.f32.mxu0 0.0
    %161 = vmatmul.mubr.f32.gmra.mxu0 %v94
    %v162 = vpop.f32.mrf.mxu0
    %v163 = vadd.f32 %v85, %v162
    %v164 = vpop.f32.mrf.mxu0
    %v165 = vadd.f32 %v89, %v164
    %166 = vdwg.mxu0
    %v167 = vmax.f32 %v163, 0.0
    %v168 = vmax.f32 %v165, 0.0
    %v169 = vld [vmem:[#allocation8] sm:$0xff]
    %v170 = vld [vmem:[#allocation8 + $0x8] sm:$0xff]
    %v171 = vld [vmem:[#allocation8 + $0x10] sm:$0xff]
    %v172 = vld [vmem:[#allocation8 + $0x18] sm:$0xff]
    %v173 = vld [vmem:[#allocation8 + $0x20] sm:$0xff]
    %v174 = vld [vmem:[#allocation8 + $0x28] sm:$0xff]
    %v175 = vld [vmem:[#allocation8 + $0x30] sm:$0xff]
    %v176 = vld [vmem:[#allocation8 + $0x38] sm:$0xff]
    %v177 = vld [vmem:[#allocation8 + $0x40] sm:$0xff]
    %v178 = vld [vmem:[#allocation8 + $0x48] sm:$0xff]
    %v179 = vld [vmem:[#allocation8 + $0x50] sm:$0xff]
    %v180 = vld [vmem:[#allocation8 + $0x58] sm:$0xff]
    %v181 = vld [vmem:[#allocation8 + $0x60] sm:$0xff]
    %v182 = vld [vmem:[#allocation8 + $0x68] sm:$0xff]
    %v183 = vld [vmem:[#allocation8 + $0x70] sm:$0xff]
    %v184 = vld [vmem:[#allocation8 + $0x78] sm:$0xff]
    %v185 = vld [vmem:[#allocation8 + $0x80] sm:$0xff]
    %v186 = vld [vmem:[#allocation8 + $0x88] sm:$0xff]
    %v187 = vld [vmem:[#allocation8 + $0x90] sm:$0xff]
    %v188 = vld [vmem:[#allocation8 + $0x98] sm:$0xff]
    %v189 = vld [vmem:[#allocation8 + $0xa0] sm:$0xff]
    %v190 = vld [vmem:[#allocation8 + $0xa8] sm:$0xff]
    %v191 = vld [vmem:[#allocation8 + $0xb0] sm:$0xff]
    %v192 = vld [vmem:[#allocation8 + $0xb8] sm:$0xff]
    %v193 = vld [vmem:[#allocation8 + $0xc0] sm:$0xff]
    %v194 = vld [vmem:[#allocation8 + $0xc8] sm:$0xff]
    %v195 = vld [vmem:[#allocation8 + $0xd0] sm:$0xff]
    %v196 = vld [vmem:[#allocation8 + $0xd8] sm:$0xff]
    %v197 = vld [vmem:[#allocation8 + $0xe0] sm:$0xff]
    %v198 = vld [vmem:[#allocation8 + $0xe8] sm:$0xff]
    %v199 = vld [vmem:[#allocation8 + $0xf0] sm:$0xff]
    %v200 = vld [vmem:[#allocation8 + $0xf8] sm:$0xff]
    %v201 = vld [vmem:[%s5] sm:$0x1]
    %v203 = vlaneseq
    %v204 = vshrl.u32 %v203, 7
    %v205 = vsub.s32 0, %v204
    %v206 = vrot.slane %v201, %v205
    %208 = vmatprep.subr.mxu0 0.0
    %209 = vmatpush1.msra.mxu0 %v184
    %210 = vmatprep.subr.mxu0 0.0
    %211 = vmatpush1.msra.mxu0 %v183
    %212 = vmatprep.subr.mxu0 0.0
    %213 = vmatpush1.msra.mxu0 %v182
    %214 = vmatprep.subr.mxu0 0.0
    %215 = vmatpush1.msra.mxu0 %v181
    %216 = vmatprep.subr.mxu0 0.0
    %217 = vmatpush1.msra.mxu0 %v180
    %218 = vmatprep.subr.mxu0 0.0
    %219 = vmatpush1.msra.mxu0 %v179
    %220 = vmatprep.subr.mxu0 0.0
    %221 = vmatpush1.msra.mxu0 %v178
    %222 = vmatprep.subr.mxu0 0.0
    %223 = vmatpush1.msra.mxu0 %v177
    %224 = vmatprep.subr.mxu0 0.0
    %225 = vmatpush1.msra.mxu0 %v176
    %226 = vmatprep.subr.mxu0 0.0
    %227 = vmatpush1.msra.mxu0 %v175
    %228 = vmatprep.subr.mxu0 0.0
    %229 = vmatpush1.msra.mxu0 %v174
    %230 = vmatprep.subr.mxu0 0.0
    %231 = vmatpush1.msra.mxu0 %v173
    %232 = vmatprep.subr.mxu0 0.0
    %233 = vmatpush1.msra.mxu0 %v172
    %234 = vmatprep.subr.mxu0 0.0
    %235 = vmatpush1.msra.mxu0 %v171
    %236 = vmatprep.subr.mxu0 0.0
    %237 = vmatpush1.msra.mxu0 %v170
    %238 = vmatprep.subr.mxu0 0.0
    %239 = vmatpush1.msra.mxu0 %v169
    %240 = vmatprep.subr.mxu0 0.0
    %241 = vmatpush2.msra.mxu0 %v200
    %242 = vmatprep.subr.mxu0 0.0
    %243 = vmatpush2.msra.mxu0 %v199
    %244 = vmatprep.subr.mxu0 0.0
    %245 = vmatpush2.msra.mxu0 %v198
    %246 = vmatprep.subr.mxu0 0.0
    %247 = vmatpush2.msra.mxu0 %v197
    %248 = vmatprep.subr.mxu0 0.0
    %249 = vmatpush2.msra.mxu0 %v196
    %250 = vmatprep.subr.mxu0 0.0
    %251 = vmatpush2.msra.mxu0 %v195
    %252 = vmatprep.subr.mxu0 0.0
    %253 = vmatpush2.msra.mxu0 %v194
    %254 = vmatprep.subr.mxu0 0.0
    %255 = vmatpush2.msra.mxu0 %v193
    %256 = vmatprep.subr.mxu0 0.0
    %257 = vmatpush2.msra.mxu0 %v192
    %258 = vmatprep.subr.mxu0 0.0
    %259 = vmatpush2.msra.mxu0 %v191
    %260 = vmatprep.subr.mxu0 0.0
    %261 = vmatpush2.msra.mxu0 %v190
    %262 = vmatprep.subr.mxu0 0.0
    %263 = vmatpush2.msra.mxu0 %v189
    %264 = vmatprep.subr.mxu0 0.0
    %265 = vmatpush2.msra.mxu0 %v188
    %266 = vmatprep.subr.mxu0 0.0
    %267 = vmatpush2.msra.mxu0 %v187
    %268 = vmatprep.subr.mxu0 0.0
    %269 = vmatpush2.msra.mxu0 %v186
    %270 = vmatprep.subr.mxu0 0.0
    %271 = vmatpush2.msra.mxu0 %v185
    %272 = vmatprep.mubr.f32.mxu0 %v168
    %273 = vmatmul.mubr.f32.gmra.mxu0 %v167
    %v274 = vpop.f32.mrf.mxu0
    %v275 = vadd.f32 %v206, %v274
    %v276 = vpop.f32.mrf.mxu0
    %277 = vdwg.mxu0
    %v278 = vtanh.pop %v275
    %v279 = vld [vmem:[#allocation5] sm:$0x3]
    %v280 = vmul.f32 %v279, 0.1
    %v281 = vadd.f32 %v278, %v280
    %v282 = vmax.f32 %v281, -0.9999
    %v283 = vmin.f32 %v282, 0.9999
    %284 = vst [vmem:[#allocation10] sm:$0x3] %v283
    // Predicated region
    $region42: #{tpu_custom_call.1} parent=1 // pred_check
      _
    $region43: #{tpu_custom_call.1} parent=1 // pred_check_branch
      %286 = sbr.rel (0) target = $region45
    $region44: #{tpu_custom_call.1} parent=1 // pred_region
      %s288 = ssub.s32 32, 32
      %289 = vsyncadd [#allocation4], %s288
      %s291 = sshll.u32 [#allocation10], 4
      %s292 = int_to_ptr.vmem [resolvable:$true] %s291
      %294 = dma.vmem_to_hbm [thread:$0]  %s292, 32, %s6, [#allocation4]
    $region45: #{tpu_custom_call.1} parent=1 // pred_fallthru
      _
    // Predicated region
    $region46: #{tpu_custom_call.1} parent=1 // pred_check
      _
    $region47: #{tpu_custom_call.1} parent=1 // pred_check_branch
      %296 = sbr.rel (0) target = $region49
    $region48: #{tpu_custom_call.1} parent=1 // pred_region
      %297 = dma.done [#allocation4], 32
    $region49: #{tpu_custom_call.1} parent=1 // pred_fallthru
      _
    %298 = vsyncpa [#allocation3], 1
    %299 = vsyncpa [#allocation6], 1
    %300 = vsyncpa [#allocation9], 1
    %301 = vsyncpa [#allocation4], 1

</llo_original>
